<compile_context>
chip_gen: v6e
topology: v6e:2x2x1
jax: 0.10.0
libtpu: 0.0.40
codegen_flags: <defaults>
</compile_context>

<pallas_src>
import functools

import jax
import jax.numpy as jnp
import numpy as np
from jax.experimental import pallas as pl
from jax.experimental.pallas import tpu as pltpu


def _hroll_half(t, W):
    """out[..., j] = t[..., (j + W//2) % W]  (== torch.arange(-W//2, W//2) gather)."""
    half = W // 2
    if W % 128 == 0:
        # Lane-aligned (hence even) width: one XLU rotate per vreg.  For even W a
        # rotate by exactly W/2 is its own inverse, so the shift sign is moot.
        return pltpu.roll(t, half, axis=-1)
    # Narrow / odd widths: two lane slices + concat (always lowers, tiny slab).
    return jnp.concatenate([t[..., half:], t[..., :half]], axis=-1)


def _ud_pad_kernel(x_ref, o_ref, *, H, W, P):
    # x_ref block: (B, H, W); o_ref block: (B, H + 2P, W)

    # 1) Body: straight copy of the H interior rows into output rows [P, P+H).
    o_ref[:, P:P + H, :] = x_ref[...]

    # 2) Only the 2P boundary rows need the horizontal half-roll.
    top_r = _hroll_half(x_ref[:, 0:P, :], W)        # (B, P, W)  rows 0..P-1, rolled
    bot_r = _hroll_half(x_ref[:, H - P:H, :], W)    # (B, P, W)  rows H-P..H-1, rolled

    # 3) Row-flip via P direct per-row stores (no output-sized temporaries).
    #    up   row p = rolled(top) row (P-1-p)   -> output row p
    #    down row p = rolled(bot) row (P-1-p)   -> output row P+H+p
    for p in range(P):
        o_ref[:, p:p + 1, :] = top_r[:, P - 1 - p:P - p, :]
        o_ref[:, P + H + p:P + H + p + 1, :] = bot_r[:, P - 1 - p:P - p, :]


def ud_pad_pallas(x, padding=1, *, block_bytes=2 << 20):
    """Pallas implementation of ud_pad for NCHW input."""
    N, C, H, W = x.shape
    P = padding
    assert 1 <= P <= H, "padding must satisfy 1 <= padding <= H"
    NC = N * C
    xf = x.reshape(NC, H, W)

    # Batch B images per block so in+out per block is roughly `block_bytes`
    # (double-buffered by the pipeline -> stays far below scoped-VMEM limits).
    itemsize = np.dtype(x.dtype).itemsize
    per_image = (2 * H + 2 * P) * W * itemsize
    B = int(max(1, min(NC, block_bytes // per_image)))
    grid = (pl.cdiv(NC, B),)

    out = pl.pallas_call(
        functools.partial(_ud_pad_kernel, H=H, W=W, P=P),
        out_shape=jax.ShapeDtypeStruct((NC, H + 2 * P, W), x.dtype),
        grid=grid,
        in_specs=[pl.BlockSpec((B, H, W), lambda i: (i, 0, 0))],
        out_specs=pl.BlockSpec((B, H + 2 * P, W), lambda i: (i, 0, 0)),
        compiler_params=pltpu.CompilerParams(
            dimension_semantics=("parallel",)),
    )(xf)

    return out.reshape(N, C, H + 2 * P, W)


def ud_pad_ref(x, padding=1):
    """Pure-JAX reference matching the PyTorch ud_pad semantics."""
    W = x.shape[-1]
    idx = np.arange(-W // 2, W // 2) % W            # python floor-div, like torch
    rolled = x[:, :, :, idx]
    up = jnp.flip(rolled[:, :, :padding, :], axis=2)
    down = jnp.flip(rolled[:, :, -padding:, :], axis=2)
    return jnp.concatenate([up, x, down], axis=2)


if __name__ == "__main__":
    key = jax.random.PRNGKey(0)

    # Primary case (matches the module's typical use): N=2, C=4, H=W=16, padding=1.
    x = jax.random.normal(key, (2, 4, 16, 16), dtype=jnp.float32)
    out = jax.block_until_ready(ud_pad_pallas(x, padding=1))
    ref = ud_pad_ref(x, padding=1)
    assert out.shape == (2, 4, 18, 16), out.shape
    np.testing.assert_allclose(np.asarray(out), np.asarray(ref), rtol=0, atol=0)

    # Secondary check: padding > 1 with a different spatial shape.
    x2 = jax.random.normal(jax.random.PRNGKey(1), (1, 3, 8, 12), dtype=jnp.float32)
    out2 = jax.block_until_ready(ud_pad_pallas(x2, padding=2))
    ref2 = ud_pad_ref(x2, padding=2)
    np.testing.assert_allclose(np.asarray(out2), np.asarray(ref2), rtol=0, atol=0)

    print("KERNEL_OK")
</pallas_src>

<mosaic_0001>
module attributes {stable_mosaic.version = 11 : i64} {
  func.func @_ud_pad_kernel(%arg0: i32, %arg1: memref<8x16x16xf32, #tpu.memory_space<vmem>>, %arg2: memref<8x18x16xf32, #tpu.memory_space<vmem>>) attributes {dimension_semantics = [#tpu.dimension_semantics<parallel>], iteration_bounds = array<i64: 1>, scalar_prefetch = 0 : i64, scratch_operands = 0 : i64, tpu.core_type = #tpu.core_type<tc>, window_params = [{transform_indices = @transform_0, window_bounds = array<i64: 8, 16, 16>}, {transform_indices = @transform_1, window_bounds = array<i64: 8, 18, 16>}]} {
    %c0 = arith.constant 0 : index
    %c0_0 = arith.constant 0 : index
    %c0_1 = arith.constant 0 : index
    %0 = vector.load %arg1[%c0, %c0_0, %c0_1] : memref<8x16x16xf32, #tpu.memory_space<vmem>>, vector<8x16x16xf32>
    %c0_2 = arith.constant 0 : index
    %c1 = arith.constant 1 : index
    %c0_3 = arith.constant 0 : index
    %1 = vector.load %arg2[%c0_2, %c1, %c0_3] : memref<8x18x16xf32, #tpu.memory_space<vmem>>, vector<8x16x16xf32>
    tpu.vector_store %arg2[%c0_2, %c1, %c0_3], %0 {strides = array<i32>} : memref<8x18x16xf32, #tpu.memory_space<vmem>>, vector<8x16x16xf32>,
    %c0_4 = arith.constant 0 : index
    %c0_5 = arith.constant 0 : index
    %c0_6 = arith.constant 0 : index
    %2 = vector.load %arg1[%c0_4, %c0_5, %c0_6] : memref<8x16x16xf32, #tpu.memory_space<vmem>>, vector<8x1x16xf32>
    %3 = vector.extract_strided_slice %2 {offsets = [0, 0, 8], sizes = [8, 1, 8], strides = [1, 1, 1]} : vector<8x1x16xf32> to vector<8x1x8xf32>
    %4 = vector.extract_strided_slice %2 {offsets = [0, 0, 0], sizes = [8, 1, 8], strides = [1, 1, 1]} : vector<8x1x16xf32> to vector<8x1x8xf32>
    %5 = tpu.concatenate %3, %4 in 2 : vector<8x1x8xf32>, vector<8x1x8xf32> -> vector<8x1x16xf32>
    %c0_7 = arith.constant 0 : index
    %c15 = arith.constant 15 : index
    %c0_8 = arith.constant 0 : index
    %6 = vector.load %arg1[%c0_7, %c15, %c0_8] : memref<8x16x16xf32, #tpu.memory_space<vmem>>, vector<8x1x16xf32>
    %7 = vector.extract_strided_slice %6 {offsets = [0, 0, 8], sizes = [8, 1, 8], strides = [1, 1, 1]} : vector<8x1x16xf32> to vector<8x1x8xf32>
    %8 = vector.extract_strided_slice %6 {offsets = [0, 0, 0], sizes = [8, 1, 8], strides = [1, 1, 1]} : vector<8x1x16xf32> to vector<8x1x8xf32>
    %9 = tpu.concatenate %7, %8 in 2 : vector<8x1x8xf32>, vector<8x1x8xf32> -> vector<8x1x16xf32>
    %c0_9 = arith.constant 0 : index
    %c0_10 = arith.constant 0 : index
    %c0_11 = arith.constant 0 : index
    %10 = vector.load %arg2[%c0_9, %c0_10, %c0_11] : memref<8x18x16xf32, #tpu.memory_space<vmem>>, vector<8x1x16xf32>
    tpu.vector_store %arg2[%c0_9, %c0_10, %c0_11], %5 {strides = array<i32>} : memref<8x18x16xf32, #tpu.memory_space<vmem>>, vector<8x1x16xf32>,
    %c0_12 = arith.constant 0 : index
    %c17 = arith.constant 17 : index
    %c0_13 = arith.constant 0 : index
    %11 = vector.load %arg2[%c0_12, %c17, %c0_13] : memref<8x18x16xf32, #tpu.memory_space<vmem>>, vector<8x1x16xf32>
    tpu.vector_store %arg2[%c0_12, %c17, %c0_13], %9 {strides = array<i32>} : memref<8x18x16xf32, #tpu.memory_space<vmem>>, vector<8x1x16xf32>,
    return
  }
  func.func @transform_0(%arg0: i32) -> (i32, i32, i32) {
    %c0_i32 = arith.constant 0 : i32
    %c0_i32_0 = arith.constant 0 : i32
    %c0_i32_1 = arith.constant 0 : i32
    return %arg0, %c0_i32, %c0_i32_0 : i32, i32, i32
  }
  func.func @transform_1(%arg0: i32) -> (i32, i32, i32) {
    %c0_i32 = arith.constant 0 : i32
    %c0_i32_0 = arith.constant 0 : i32
    %c0_i32_1 = arith.constant 0 : i32
    return %arg0, %c0_i32, %c0_i32_0 : i32, i32, i32
  }
}

</mosaic_0001>

<llo_original>
// kernel: tpu_custom_call.1
$region0: #{tpu_custom_call.1}
  #allocation0 [shape = 'u32[]', space=smem, size = 0x4, offset = 0x4, fixed_abs, tag = 'smem constant byte address 0x4 - core index']
  #allocation1 [shape = 'u32[144,128]{1,0:T(1,128)}', space=vmem, size = 0x12000, scoped, tag = 'internal scratch']
  %s0 = inlined_call_operand.hbm [shape: f32[8,16,16], index: 0, kind: input, shape index: {}]
  %s1 = inlined_call_operand.vmem [shape: f32[8,18,16], index: 1, kind: output, shape index: {}]
  %s2 = sld [smem:[#allocation0]]
  $region18: #{tpu_custom_call.1} parent=0
    _
  %s4 = ssub.s32 1, %s2
  %s5 = scalar_select 0, %s4, %s2
  $region1: #{tpu_custom_call.1} parent=0
    #allocation2 [shape = 'u8[65536]{0}', space=vmem, size = 0x10000, scoped, tag = 'input window, operand 0, single buffered']
    #allocation3 [shape = 's32[1]{0}', space=sflag, size = 0x4, scoped, tag = 'scoped memory for tpu_custom_call.1']
    %6 = vsyncpa [#allocation3], 0
    // Predicated region
    $region2: #{tpu_custom_call.1} parent=1 // pred_check
      _
    $region3: #{tpu_custom_call.1} parent=1 // pred_check_branch
      %8 = sbr.rel (0) target = $region5
    $region4: #{tpu_custom_call.1} parent=1 // pred_region
      %s10 = ssub.s32 2048, 2048
      %11 = vsyncadd [#allocation3], %s10
      %s12 = sshll.u32 [#allocation2], 4
      %s13 = int_to_ptr.vmem [resolvable:$true] %s12
      %18 = dma.hbm_to_vmem [thread:$0]  %s0, 2048, %s13, [#allocation3], 128, 128, 8
    $region5: #{tpu_custom_call.1} parent=1 // pred_fallthru
      _
    // Predicated region
    $region6: #{tpu_custom_call.1} parent=1 // pred_check
      _
    $region7: #{tpu_custom_call.1} parent=1 // pred_check_branch
      %20 = sbr.rel (0) target = $region9
    $region8: #{tpu_custom_call.1} parent=1 // pred_region
      %21 = dma.done [#allocation3], 2048
    $region9: #{tpu_custom_call.1} parent=1 // pred_fallthru
      _
    %v22 = vld [vmem:[#allocation2] sm:$0xff]
    %v23 = vld [vmem:[#allocation2 + $0x8] sm:$0xff]
    %v24 = vld [vmem:[#allocation2 + $0x10] sm:$0xff]
    %v25 = vld [vmem:[#allocation2 + $0x18] sm:$0xff]
    %v26 = vld [vmem:[#allocation2 + $0x20] sm:$0xff]
    %v27 = vld [vmem:[#allocation2 + $0x28] sm:$0xff]
    %v28 = vld [vmem:[#allocation2 + $0x30] sm:$0xff]
    %v29 = vld [vmem:[#allocation2 + $0x38] sm:$0xff]
    %v30 = vld [vmem:[#allocation2 + $0x40] sm:$0xff]
    %v31 = vld [vmem:[#allocation2 + $0x48] sm:$0xff]
    %v32 = vld [vmem:[#allocation2 + $0x50] sm:$0xff]
    %v33 = vld [vmem:[#allocation2 + $0x58] sm:$0xff]
    %v34 = vld [vmem:[#allocation2 + $0x60] sm:$0xff]
    %v35 = vld [vmem:[#allocation2 + $0x68] sm:$0xff]
    %v36 = vld [vmem:[#allocation2 + $0x70] sm:$0xff]
    %v37 = vld [vmem:[#allocation2 + $0x78] sm:$0xff]
    %vm38 = vcmask 130048
    %39 = vst.msk [vmem:[%s1 + $0x1] sm:$0xff] %vm38, %v22
    %40 = vst.msk [vmem:[%s1 + $0x9] sm:$0xff] %vm38, %v23
    %41 = vst.msk [vmem:[%s1 + $0x19] sm:$0xff] %vm38, %v24
    %42 = vst.msk [vmem:[%s1 + $0x21] sm:$0xff] %vm38, %v25
    %43 = vst.msk [vmem:[%s1 + $0x31] sm:$0xff] %vm38, %v26
    %44 = vst.msk [vmem:[%s1 + $0x39] sm:$0xff] %vm38, %v27
    %45 = vst.msk [vmem:[%s1 + $0x49] sm:$0xff] %vm38, %v28
    %46 = vst.msk [vmem:[%s1 + $0x51] sm:$0xff] %vm38, %v29
    %47 = vst.msk [vmem:[%s1 + $0x61] sm:$0xff] %vm38, %v30
    %48 = vst.msk [vmem:[%s1 + $0x69] sm:$0xff] %vm38, %v31
    %49 = vst.msk [vmem:[%s1 + $0x79] sm:$0xff] %vm38, %v32
    %50 = vst.msk [vmem:[%s1 + $0x81] sm:$0xff] %vm38, %v33
    %51 = vst.msk [vmem:[%s1 + $0x91] sm:$0xff] %vm38, %v34
    %52 = vst.msk [vmem:[%s1 + $0x99] sm:$0xff] %vm38, %v35
    %53 = vst.msk [vmem:[%s1 + $0xa9] sm:$0xff] %vm38, %v36
    %54 = vst.msk [vmem:[%s1 + $0xb1] sm:$0xff] %vm38, %v37
    %v55 = vld [vmem:[#allocation2] sm:$0x1]
    %v56 = vld [vmem:[#allocation2 + $0x10] sm:$0x1]
    %v57 = vld [vmem:[#allocation2 + $0x20] sm:$0x1]
    %v58 = vld [vmem:[#allocation2 + $0x30] sm:$0x1]
    %v59 = vld [vmem:[#allocation2 + $0x40] sm:$0x1]
    %v60 = vld [vmem:[#allocation2 + $0x50] sm:$0x1]
    %v61 = vld [vmem:[#allocation2 + $0x60] sm:$0x1]
    %v62 = vld [vmem:[#allocation2 + $0x70] sm:$0x1]
    %71 = vrot.lane.b32.xlu0 %v55, 120
    %v72 = vpop.permute.xlu0 %71
    %73 = vrot.lane.b32.xlu0 %v56, 120
    %v74 = vpop.permute.xlu0 %73
    %75 = vrot.lane.b32.xlu0 %v57, 120
    %v76 = vpop.permute.xlu0 %75
    %77 = vrot.lane.b32.xlu0 %v58, 120
    %v78 = vpop.permute.xlu0 %77
    %79 = vrot.lane.b32.xlu0 %v59, 120
    %v80 = vpop.permute.xlu0 %79
    %81 = vrot.lane.b32.xlu0 %v60, 120
    %v82 = vpop.permute.xlu0 %81
    %83 = vrot.lane.b32.xlu0 %v61, 120
    %v84 = vpop.permute.xlu0 %83
    %85 = vrot.lane.b32.xlu0 %v62, 120
    %v86 = vpop.permute.xlu0 %85
    %95 = vrot.lane.b32.xlu0 %v55, 8
    %v96 = vpop.permute.xlu0 %95
    %97 = vrot.lane.b32.xlu0 %v56, 8
    %v98 = vpop.permute.xlu0 %97
    %99 = vrot.lane.b32.xlu0 %v57, 8
    %v100 = vpop.permute.xlu0 %99
    %101 = vrot.lane.b32.xlu0 %v58, 8
    %v102 = vpop.permute.xlu0 %101
    %103 = vrot.lane.b32.xlu0 %v59, 8
    %v104 = vpop.permute.xlu0 %103
    %105 = vrot.lane.b32.xlu0 %v60, 8
    %v106 = vpop.permute.xlu0 %105
    %107 = vrot.lane.b32.xlu0 %v61, 8
    %v108 = vpop.permute.xlu0 %107
    %109 = vrot.lane.b32.xlu0 %v62, 8
    %v110 = vpop.permute.xlu0 %109
    %vm119 = vcmask 64512
    %v120 = vsel %vm119, %v72, %v96
    %v121 = vsel %vm119, %v74, %v98
    %v122 = vsel %vm119, %v76, %v100
    %v123 = vsel %vm119, %v78, %v102
    %v124 = vsel %vm119, %v80, %v104
    %v125 = vsel %vm119, %v82, %v106
    %v126 = vsel %vm119, %v84, %v108
    %v127 = vsel %vm119, %v86, %v110
    %v128 = vld [vmem:[#allocation2 + $0xf] sm:$0x1]
    %v129 = vld [vmem:[#allocation2 + $0x1f] sm:$0x1]
    %v130 = vld [vmem:[#allocation2 + $0x2f] sm:$0x1]
    %v131 = vld [vmem:[#allocation2 + $0x3f] sm:$0x1]
    %v132 = vld [vmem:[#allocation2 + $0x4f] sm:$0x1]
    %v133 = vld [vmem:[#allocation2 + $0x5f] sm:$0x1]
    %v134 = vld [vmem:[#allocation2 + $0x6f] sm:$0x1]
    %v135 = vld [vmem:[#allocation2 + $0x7f] sm:$0x1]
    %144 = vrot.lane.b32.xlu0 %v128, 120
    %v145 = vpop.permute.xlu0 %144
    %146 = vrot.lane.b32.xlu0 %v129, 120
    %v147 = vpop.permute.xlu0 %146
    %148 = vrot.lane.b32.xlu0 %v130, 120
    %v149 = vpop.permute.xlu0 %148
    %150 = vrot.lane.b32.xlu0 %v131, 120
    %v151 = vpop.permute.xlu0 %150
    %152 = vrot.lane.b32.xlu0 %v132, 120
    %v153 = vpop.permute.xlu0 %152
    %154 = vrot.lane.b32.xlu0 %v133, 120
    %v155 = vpop.permute.xlu0 %154
    %156 = vrot.lane.b32.xlu0 %v134, 120
    %v157 = vpop.permute.xlu0 %156
    %158 = vrot.lane.b32.xlu0 %v135, 120
    %v159 = vpop.permute.xlu0 %158
    %168 = vrot.lane.b32.xlu0 %v128, 8
    %v169 = vpop.permute.xlu0 %168
    %170 = vrot.lane.b32.xlu0 %v129, 8
    %v171 = vpop.permute.xlu0 %170
    %172 = vrot.lane.b32.xlu0 %v130, 8
    %v173 = vpop.permute.xlu0 %172
    %174 = vrot.lane.b32.xlu0 %v131, 8
    %v175 = vpop.permute.xlu0 %174
    %176 = vrot.lane.b32.xlu0 %v132, 8
    %v177 = vpop.permute.xlu0 %176
    %178 = vrot.lane.b32.xlu0 %v133, 8
    %v179 = vpop.permute.xlu0 %178
    %180 = vrot.lane.b32.xlu0 %v134, 8
    %v181 = vpop.permute.xlu0 %180
    %182 = vrot.lane.b32.xlu0 %v135, 8
    %v183 = vpop.permute.xlu0 %182
    %v192 = vsel %vm119, %v145, %v169
    %v193 = vsel %vm119, %v147, %v171
    %v194 = vsel %vm119, %v149, %v173
    %v195 = vsel %vm119, %v151, %v175
    %v196 = vsel %vm119, %v153, %v177
    %v197 = vsel %vm119, %v155, %v179
    %v198 = vsel %vm119, %v157, %v181
    %v199 = vsel %vm119, %v159, %v183
    %vm200 = vcmask 122880
    %201 = vst.msk [vmem:[%s1] sm:$0x1] %vm200, %v120
    %202 = vst.msk [vmem:[%s1 + $0x18] sm:$0x1] %vm200, %v121
    %203 = vst.msk [vmem:[%s1 + $0x30] sm:$0x1] %vm200, %v122
    %204 = vst.msk [vmem:[%s1 + $0x48] sm:$0x1] %vm200, %v123
    %205 = vst.msk [vmem:[%s1 + $0x60] sm:$0x1] %vm200, %v124
    %206 = vst.msk [vmem:[%s1 + $0x78] sm:$0x1] %vm200, %v125
    %207 = vst.msk [vmem:[%s1 + $0x90] sm:$0x1] %vm200, %v126
    %208 = vst.msk [vmem:[%s1 + $0xa8] sm:$0x1] %vm200, %v127
    %209 = vst.msk [vmem:[%s1 + $0x11] sm:$0x1] %vm200, %v192
    %210 = vst.msk [vmem:[%s1 + $0x29] sm:$0x1] %vm200, %v193
    %211 = vst.msk [vmem:[%s1 + $0x41] sm:$0x1] %vm200, %v194
    %212 = vst.msk [vmem:[%s1 + $0x59] sm:$0x1] %vm200, %v195
    %213 = vst.msk [vmem:[%s1 + $0x71] sm:$0x1] %vm200, %v196
    %214 = vst.msk [vmem:[%s1 + $0x89] sm:$0x1] %vm200, %v197
    %215 = vst.msk [vmem:[%s1 + $0xa1] sm:$0x1] %vm200, %v198
    %216 = vst.msk [vmem:[%s1 + $0xb9] sm:$0x1] %vm200, %v199
    // Predicated region
    $region10: #{tpu_custom_call.1} parent=1 // pred_check
      _
    $region11: #{tpu_custom_call.1} parent=1 // pred_check_branch
      %218 = sbr.rel (0) target = $region13
    $region12: #{tpu_custom_call.1} parent=1 // pred_region
      _
    $region13: #{tpu_custom_call.1} parent=1 // pred_fallthru
      _
    // Predicated region
    $region14: #{tpu_custom_call.1} parent=1 // pred_check
      _
    $region15: #{tpu_custom_call.1} parent=1 // pred_check_branch
      %220 = sbr.rel (0) target = $region17
    $region16: #{tpu_custom_call.1} parent=1 // pred_region
      _
    $region17: #{tpu_custom_call.1} parent=1 // pred_fallthru
      _
    %221 = vsyncpa [#allocation3], 1

</llo_original>
